<compile_context>
chip_gen: v7x
topology: tpu7x:2x2x1
jax: 0.10.0
libtpu: 0.0.40
codegen_flags: <defaults>
</compile_context>

<pallas_src>
import functools

import jax
import jax.numpy as jnp
from jax.experimental import pallas as pl
from jax.experimental.pallas import tpu as pltpu


# ---------------------------------------------------------------------------
# helpers
# ---------------------------------------------------------------------------

def _vmem_budget():
    """Per-generation (block byte budget, vmem_limit_bytes)."""
    try:
        vmem = int(pltpu.get_tpu_info().vmem_capacity_bytes)
    except Exception:
        vmem = 64 << 20            # unknown: assume the smallest (v7x-like) VMEM
    if vmem >= (96 << 20):         # v5e / v6e: 128 MiB physical VMEM
        return 8 << 20, 64 << 20
    return 4 << 20, 40 << 20       # v7x: 64 MiB physical VMEM


def _apply_gamma(pt, logpt, gamma):
    """-(1 - pt)**gamma * logpt, specialized at trace time on the Python gamma."""
    g = float(gamma)
    if g == 0.0:
        return -logpt
    if g.is_integer() and g > 0:
        omp = 1.0 - pt
        factor = omp
        for _ in range(int(g) - 1):
            factor = factor * omp
        return -factor * logpt
    # TODO(synk): PyTorch yields NaN for pt > 1 (non-log-prob inputs); we clamp.
    factor = jnp.power(jnp.maximum(1.0 - pt, 0.0), g)
    return -factor * logpt


def _pick_hw_tile(hw, c, itemsize, target_bytes):
    """Spatial tile (multiple of 128) whose sublane-padded block is ~target_bytes."""
    sub = max(8, (8 * 4) // max(int(itemsize), 1))       # 8 f32 / 16 bf16 / 32 i8
    padded_c = -(-int(c) // sub) * sub                   # class axis sublane pad
    per_col = padded_c * int(itemsize)
    tile = max(128, (int(target_bytes) // per_col) // 128 * 128)
    hw_min = -(-int(hw) // 128) * 128                    # padded full extent
    return int(min(tile, hw_min))


def _pick_row_tile(rows, c, itemsize, target_bytes):
    """Row tile (multiple of 8) whose lane-padded block is ~target_bytes."""
    lanes_c = -(-int(c) // 128) * 128                    # class axis lane pad
    per_row = lanes_c * int(itemsize)
    tile = max(8, (int(target_bytes) // per_row) // 8 * 8)
    rows_min = -(-int(rows) // 8) * 8
    return int(min(tile, rows_min))


# ---------------------------------------------------------------------------
# kernels
# ---------------------------------------------------------------------------

def _focal_loss_nchw_kernel(logp_ref, tgt_ref, alpha_ref, out_ref, *,
                            gamma, use_alpha):
    """NCHW path: classes on sublanes, spatial lane-dense, one partial per step."""
    logp = logp_ref[0]                                   # (C, HT), native dtype
    tgt = tgt_ref[0].astype(jnp.int32)                   # (1, HT) tiny cast
    c, ht = logp.shape

    class_ids = jax.lax.broadcasted_iota(jnp.int32, (c, ht), 0)
    mask = class_ids == tgt                              # (C, HT) bool

    # masked select + sublane reduce: exactly one hit per column, so reducing
    # in the input dtype is exact -> no block-wide f32 upcast, no one-hot temp
    logpt = jnp.where(mask, logp, jnp.zeros_like(logp))
    logpt = jnp.sum(logpt, axis=0, keepdims=True).astype(jnp.float32)   # (1, HT)
    pt = jnp.exp(logpt)

    if use_alpha:
        alpha = alpha_ref[...].astype(jnp.float32)       # (C, 1)
        at = jnp.sum(jnp.where(mask, alpha, 0.0), axis=0, keepdims=True)
        logpt = logpt * at

    loss = _apply_gamma(pt, logpt, gamma)                # (1, HT)
    # one cross-lane reduce per step (XLU slot, otherwise idle in this kernel)
    out_ref[...] = jnp.sum(loss, axis=-1, keepdims=True).reshape(1, 1, 1, 1)


def _focal_loss_rows_kernel(logp_ref, tgt_ref, alpha_ref, out_ref, *,
                            gamma, use_alpha):
    """(rows, C) path: rows on sublanes, classes lane-dense (no wrapper transpose)."""
    logp = logp_ref[...]                                 # (RT, C), native dtype
    tgt = tgt_ref[...].astype(jnp.int32)                 # (RT, 1)
    rt, c = logp.shape

    class_ids = jax.lax.broadcasted_iota(jnp.int32, (rt, c), 1)
    mask = class_ids == tgt                              # (RT, C) bool

    logpt = jnp.where(mask, logp, jnp.zeros_like(logp))
    logpt = jnp.sum(logpt, axis=1, keepdims=True).astype(jnp.float32)   # (RT, 1)
    pt = jnp.exp(logpt)

    if use_alpha:
        alpha = alpha_ref[...].astype(jnp.float32)       # (1, C)
        at = jnp.sum(jnp.where(mask, alpha, 0.0), axis=1, keepdims=True)
        logpt = logpt * at

    loss = _apply_gamma(pt, logpt, gamma)                # (RT, 1)
    out_ref[...] = jnp.sum(loss, axis=0, keepdims=True).reshape(1, 1, 1)


# ---------------------------------------------------------------------------
# pallas_call wrappers
# ---------------------------------------------------------------------------

def _nchw_total(x3, tgt3, alpha_col, gamma, use_alpha, block_bytes, vmem_limit):
    n, c, hw = x3.shape
    itemsize = jnp.dtype(x3.dtype).itemsize
    hw_tile = _pick_hw_tile(hw, c, itemsize, block_bytes)
    hw_pad = -(-hw // hw_tile) * hw_tile

    # compact target stream: 1 B/pos instead of 4 B/pos when the class id fits
    tgt_dtype = jnp.int8 if c <= 127 else jnp.int32
    tgt3 = tgt3.astype(tgt_dtype)
    if hw_pad != hw:
        # padded columns: target=class 0, logp=0 -> contribute exactly 0 loss
        x3 = jnp.pad(x3, ((0, 0), (0, 0), (0, hw_pad - hw)))
        tgt3 = jnp.pad(tgt3, ((0, 0), (0, 0), (0, hw_pad - hw)))
    n_tiles = hw_pad // hw_tile

    kernel = functools.partial(_focal_loss_nchw_kernel, gamma=float(gamma),
                               use_alpha=use_alpha)
    partials = pl.pallas_call(
        kernel,
        out_shape=jax.ShapeDtypeStruct((n, n_tiles, 1, 1), jnp.float32),
        grid_spec=pltpu.PrefetchScalarGridSpec(
            num_scalar_prefetch=0,
            grid=(n, n_tiles),
            in_specs=[
                pl.BlockSpec((1, c, hw_tile), lambda ni, hi: (ni, 0, hi)),
                pl.BlockSpec((1, 1, hw_tile), lambda ni, hi: (ni, 0, hi)),
                pl.BlockSpec((c, 1), lambda ni, hi: (0, 0)),
            ],
            out_specs=pl.BlockSpec((1, 1, 1, 1), lambda ni, hi: (ni, hi, 0, 0)),
        ),
        compiler_params=pltpu.CompilerParams(
            # no cross-step state -> both axes parallel (v7x dual-TC splits hw)
            dimension_semantics=("parallel", "parallel"),
            vmem_limit_bytes=vmem_limit,
        ),
    )(x3, tgt3, alpha_col)
    return jnp.sum(partials)


def _rows_total(x2, tgt2, alpha_row, gamma, use_alpha, block_bytes, vmem_limit):
    rows, c = x2.shape
    itemsize = jnp.dtype(x2.dtype).itemsize
    rt = _pick_row_tile(rows, c, itemsize, block_bytes)
    rows_pad = -(-rows // rt) * rt

    tgt2 = tgt2.astype(jnp.int32)
    if rows_pad != rows:
        x2 = jnp.pad(x2, ((0, rows_pad - rows), (0, 0)))
        tgt2 = jnp.pad(tgt2, ((0, rows_pad - rows), (0, 0)))
    n_tiles = rows_pad // rt

    kernel = functools.partial(_focal_loss_rows_kernel, gamma=float(gamma),
                               use_alpha=use_alpha)
    partials = pl.pallas_call(
        kernel,
        out_shape=jax.ShapeDtypeStruct((n_tiles, 1, 1), jnp.float32),
        grid_spec=pltpu.PrefetchScalarGridSpec(
            num_scalar_prefetch=0,
            grid=(n_tiles,),
            in_specs=[
                pl.BlockSpec((rt, c), lambda i: (i, 0)),
                pl.BlockSpec((rt, 1), lambda i: (i, 0)),
                pl.BlockSpec((1, c), lambda i: (0, 0)),
            ],
            out_specs=pl.BlockSpec((1, 1, 1), lambda i: (i, 0, 0)),
        ),
        compiler_params=pltpu.CompilerParams(
            dimension_semantics=("parallel",),
            vmem_limit_bytes=vmem_limit,
        ),
    )(x2, tgt2, alpha_row)
    return jnp.sum(partials)


def focal_loss_pallas(input_x, target, *, gamma=0.0, alpha=None,
                      size_average=True, block_bytes=None):
    """input_x: NCHW (or (rows, C)) per-class log-probabilities; target: int ids."""
    budget, vmem_limit = _vmem_budget()
    if block_bytes is not None:
        budget = int(block_bytes)

    c = input_x.shape[1]

    # alpha handling (mirrors __init__): scalar -> [a, 1-a]; list -> tensor; None -> skip
    use_alpha = alpha is not None
    if alpha is None:
        alpha_vec = jnp.ones((c,), dtype=jnp.float32)
    elif isinstance(alpha, (float, int)):
        alpha_vec = jnp.array([float(alpha), 1.0 - float(alpha)], dtype=jnp.float32)
    else:
        alpha_vec = jnp.asarray(alpha, dtype=jnp.float32).reshape(-1)
    assert alpha_vec.shape[0] == c, "alpha must provide one weight per class"

    if input_x.ndim > 2:
        n = input_x.shape[0]
        x3 = input_x.reshape(n, c, -1)                   # native NCHW, no transpose
        hw = x3.shape[2]
        tgt3 = target.reshape(n, 1, -1)
        total = _nchw_total(x3, tgt3, alpha_vec.reshape(c, 1), gamma, use_alpha,
                            budget, vmem_limit)
        denom = n * hw
    else:
        x2 = input_x                                     # (rows, C), consumed natively
        rows = x2.shape[0]
        tgt2 = target.reshape(-1, 1)
        total = _rows_total(x2, tgt2, alpha_vec.reshape(1, c), gamma, use_alpha,
                            budget, vmem_limit)
        denom = rows

    if size_average:
        total = total / float(denom)
    return total


# ---------------------------------------------------------------------------
# pure-JAX reference (mirrors the PyTorch forward)
# ---------------------------------------------------------------------------

def focal_loss_ref(input_x, target, *, gamma=0.0, alpha=None, size_average=True):
    if input_x.ndim > 2:
        n, c = input_x.shape[0], input_x.shape[1]
        x = input_x.reshape(n, c, -1)
        x = jnp.transpose(x, (0, 2, 1)).reshape(-1, c)
    else:
        x = input_x
        c = x.shape[1]
    x = x.astype(jnp.float32)
    t = target.reshape(-1).astype(jnp.int32)
    logpt = jnp.take_along_axis(x, t[:, None], axis=1)[:, 0]
    pt = jnp.exp(logpt)
    if alpha is not None:
        if isinstance(alpha, (float, int)):
            alpha_arr = jnp.array([float(alpha), 1.0 - float(alpha)],
                                  dtype=jnp.float32)
        else:
            alpha_arr = jnp.asarray(alpha, dtype=jnp.float32).reshape(-1)
        logpt = logpt * alpha_arr[t]
    loss = -1.0 * (1.0 - pt) ** float(gamma) * logpt
    return jnp.mean(loss) if size_average else jnp.sum(loss)


if __name__ == "__main__":
    key = jax.random.PRNGKey(0)
    k1, k2, k3, k4 = jax.random.split(key, 4)

    # NCHW config: log-probabilities over the class axis, int targets in [0, C)
    N, C, H, W = 2, 4, 16, 16
    logits = jax.random.normal(k1, (N, C, H, W), dtype=jnp.float32)
    logprobs = jax.nn.log_softmax(logits, axis=1)
    target = jax.random.randint(k2, (N, H, W), 0, C, dtype=jnp.int32)

    # config 1: gamma=2, per-class alpha list, mean reduction
    out = focal_loss_pallas(logprobs, target, gamma=2.0,
                            alpha=[0.1, 0.2, 0.3, 0.4], size_average=True)
    out = jax.block_until_ready(out)
    ref = focal_loss_ref(logprobs, target, gamma=2.0,
                         alpha=[0.1, 0.2, 0.3, 0.4], size_average=True)
    assert jnp.allclose(out, ref, rtol=1e-5, atol=1e-6), (out, ref)

    # config 2: gamma=0, no alpha, sum reduction
    out2 = focal_loss_pallas(logprobs, target, gamma=0.0, alpha=None,
                             size_average=False)
    out2 = jax.block_until_ready(out2)
    ref2 = focal_loss_ref(logprobs, target, gamma=0.0, alpha=None,
                          size_average=False)
    assert jnp.allclose(out2, ref2, rtol=1e-5, atol=1e-5), (out2, ref2)

    # config 3: 2-D (rows, C) path, scalar alpha, non-integer gamma
    rows, C2 = 64, 2
    logits2 = jax.random.normal(k3, (rows, C2), dtype=jnp.float32)
    logprobs2 = jax.nn.log_softmax(logits2, axis=1)
    target2 = jax.random.randint(k4, (rows,), 0, C2, dtype=jnp.int32)
    out3 = focal_loss_pallas(logprobs2, target2, gamma=1.5, alpha=0.25,
                             size_average=True)
    out3 = jax.block_until_ready(out3)
    ref3 = focal_loss_ref(logprobs2, target2, gamma=1.5, alpha=0.25,
                          size_average=True)
    assert jnp.allclose(out3, ref3, rtol=1e-5, atol=1e-6), (out3, ref3)

    print("KERNEL_OK")
</pallas_src>

<mosaic_0001>
module attributes {stable_mosaic.version = 11 : i64} {
  func.func @_focal_loss_nchw_kernel(%arg0: i32, %arg1: i32, %arg2: memref<1x4x256xf32, #tpu.memory_space<vmem>>, %arg3: memref<1x1x256xi8, #tpu.memory_space<vmem>>, %arg4: memref<4x1xf32, #tpu.memory_space<vmem>>, %arg5: memref<1x1x1x1xf32, #tpu.memory_space<vmem>>) attributes {dimension_semantics = [#tpu.dimension_semantics<parallel>, #tpu.dimension_semantics<parallel>], iteration_bounds = array<i64: 2, 1>, scalar_prefetch = 0 : i64, scratch_operands = 0 : i64, tpu.core_type = #tpu.core_type<tc>, window_params = [{transform_indices = @transform_0, window_bounds = array<i64: 1, 4, 256>}, {transform_indices = @transform_1, window_bounds = array<i64: 1, 1, 256>}, {pipeline_mode = #tpu.pipeline_mode<synchronous>, transform_indices = @transform_2, window_bounds = array<i64: 4, 1>}, {transform_indices = @transform_3, window_bounds = array<i64: 1, 1, 1, 1>}]} {
    %c0 = arith.constant 0 : index
    %c0_0 = arith.constant 0 : index
    %c0_1 = arith.constant 0 : index
    %0 = vector.load %arg2[%c0, %c0_0, %c0_1] : memref<1x4x256xf32, #tpu.memory_space<vmem>>, vector<1x4x256xf32>
    %1 = vector.shape_cast %0 : vector<1x4x256xf32> to vector<4x256xf32>
    %c0_2 = arith.constant 0 : index
    %c0_3 = arith.constant 0 : index
    %c0_4 = arith.constant 0 : index
    %2 = vector.load %arg3[%c0_2, %c0_3, %c0_4] : memref<1x1x256xi8, #tpu.memory_space<vmem>>, vector<1x1x256xi8>
    %3 = vector.shape_cast %2 : vector<1x1x256xi8> to vector<1x256xi8>
    %4 = arith.extsi %3 : vector<1x256xi8> to vector<1x256xi32>
    %5 = tpu.iota {dimensions = array<i32: 0>} : vector<4x256xi32>
    %6 = vector.broadcast %4 : vector<1x256xi32> to vector<4x256xi32>
    %7 = arith.cmpi eq, %5, %6 : vector<4x256xi32>
    %cst = arith.constant 0.000000e+00 : f32
    %8 = vector.broadcast %cst : f32 to vector<4x256xf32>
    %9 = arith.select %7, %1, %8 : vector<4x256xi1>, vector<4x256xf32>
    %cst_5 = arith.constant dense<0.000000e+00> : vector<256xf32>
    %10 = vector.multi_reduction <add>, %9, %cst_5 [0] : vector<4x256xf32> to vector<256xf32>
    %11 = vector.shape_cast %10 : vector<256xf32> to vector<1x256xf32>
    %12 = math.exp %11 : vector<1x256xf32>
    %c0_6 = arith.constant 0 : index
    %c0_7 = arith.constant 0 : index
    %13 = vector.load %arg4[%c0_6, %c0_7] : memref<4x1xf32, #tpu.memory_space<vmem>>, vector<4x1xf32>
    %cst_8 = arith.constant 0.000000e+00 : f32
    %14 = vector.shape_cast %13 : vector<4x1xf32> to vector<4x1xf32>
    %15 = vector.broadcast %14 : vector<4x1xf32> to vector<4x256xf32>
    %16 = vector.broadcast %cst_8 : f32 to vector<4x256xf32>
    %17 = arith.select %7, %15, %16 : vector<4x256xi1>, vector<4x256xf32>
    %cst_9 = arith.constant dense<0.000000e+00> : vector<256xf32>
    %18 = vector.multi_reduction <add>, %17, %cst_9 [0] : vector<4x256xf32> to vector<256xf32>
    %19 = vector.shape_cast %18 : vector<256xf32> to vector<1x256xf32>
    %20 = arith.mulf %11, %19 : vector<1x256xf32>
    %cst_10 = arith.constant 1.000000e+00 : f32
    %21 = vector.broadcast %cst_10 : f32 to vector<1x256xf32>
    %22 = arith.subf %21, %12 : vector<1x256xf32>
    %23 = arith.mulf %22, %22 : vector<1x256xf32>
    %cst_11 = arith.constant 0.000000e+00 : f32
    %24 = vector.broadcast %cst_11 : f32 to vector<1x256xf32>
    %25 = arith.subf %24, %23 : vector<1x256xf32>
    %26 = arith.mulf %25, %20 : vector<1x256xf32>
    %cst_12 = arith.constant dense<0.000000e+00> : vector<1xf32>
    %27 = vector.multi_reduction <add>, %26, %cst_12 [1] : vector<1x256xf32> to vector<1xf32>
    %28 = vector.shape_cast %27 : vector<1xf32> to vector<1x1xf32>
    %29 = vector.shape_cast %28 : vector<1x1xf32> to vector<1x1x1x1xf32>
    %c0_13 = arith.constant 0 : index
    %c0_14 = arith.constant 0 : index
    %c0_15 = arith.constant 0 : index
    %c0_16 = arith.constant 0 : index
    %30 = vector.load %arg5[%c0_13, %c0_14, %c0_15, %c0_16] : memref<1x1x1x1xf32, #tpu.memory_space<vmem>>, vector<1x1x1x1xf32>
    tpu.vector_store %arg5[%c0_13, %c0_14, %c0_15, %c0_16], %29 {strides = array<i32>} : memref<1x1x1x1xf32, #tpu.memory_space<vmem>>, vector<1x1x1x1xf32>,
    return
  }
  func.func @transform_0(%arg0: i32, %arg1: i32) -> (i32, i32, i32) {
    %c0_i32 = arith.constant 0 : i32
    %c0_i32_0 = arith.constant 0 : i32
    return %arg0, %c0_i32, %arg1 : i32, i32, i32
  }
  func.func @transform_1(%arg0: i32, %arg1: i32) -> (i32, i32, i32) {
    %c0_i32 = arith.constant 0 : i32
    %c0_i32_0 = arith.constant 0 : i32
    return %arg0, %c0_i32, %arg1 : i32, i32, i32
  }
  func.func @transform_2(%arg0: i32, %arg1: i32) -> (i32, i32) {
    %c0_i32 = arith.constant 0 : i32
    %c0_i32_0 = arith.constant 0 : i32
    %c0_i32_1 = arith.constant 0 : i32
    return %c0_i32, %c0_i32_0 : i32, i32
  }
  func.func @transform_3(%arg0: i32, %arg1: i32) -> (i32, i32, i32, i32) {
    %c0_i32 = arith.constant 0 : i32
    %c0_i32_0 = arith.constant 0 : i32
    %c0_i32_1 = arith.constant 0 : i32
    return %arg0, %arg1, %c0_i32, %c0_i32_0 : i32, i32, i32, i32
  }
}

</mosaic_0001>

<llo_original>
// kernel: tpu_custom_call.1
$region0: #{tpu_custom_call.1}
  #allocation0 [shape = 'u32[]', space=smem, size = 0x4, offset = 0x4, fixed_abs, tag = 'smem constant byte address 0x4 - core index']
  #allocation1 [shape = 'u32[144,128]{1,0:T(1,128)}', space=vmem, size = 0x12000, scoped, tag = 'internal scratch']
  %s0 = inlined_call_operand.hbm [shape: f32[2,4,256], index: 0, kind: input, shape index: {}]
  %s1 = inlined_call_operand.vmem [shape: s8[2,1,256], index: 1, kind: input, shape index: {}]
  %s2 = inlined_call_operand.vmem [shape: f32[4,1], index: 2, kind: input, shape index: {}]
  %s3 = inlined_call_operand.vmem [shape: f32[2,1,1,1], index: 3, kind: output, shape index: {}]
  %s4 = sld [smem:[#allocation0]]
  $region49: #{tpu_custom_call.1} parent=0
    _
  %s6 = ssub.s32 1, %s4
  %s7 = scalar_select 0, %s6, %s4
  $region1: #{tpu_custom_call.1} parent=0
    #allocation2 [shape = 'u8[8192]{0}', space=vmem, size = 0x2000, scoped, tag = 'input window, operand 0']
    #allocation3 [shape = 's32[2]{0}', space=sflag, size = 0x8, scoped, tag = 'scoped memory for tpu_custom_call.1']
    %8 = vsyncpa [#allocation3], 0
    %s9 = scalar_lea.sflag [#allocation3], 1
    %10 = vsyncpa %s9, 0
    loop: start=0, step=1, limit=4
    $region2: #{tpu_custom_call.1} parent=1 // loop_pre_header
      _
    $region3: #{tpu_custom_call.1} parent=1 // loop_header
      %s12 = sphi 0, %s16
      %p13 = scmp.ge.s32.totalorder %s12, 4
      %s19 = sphi 0, %s31
      %s20 = sphi 0, %s27
      %s21 = sphi 0, %s19
      %s22 = sphi 0, %s20
      %s23 = sphi 0, %s21
      %s24 = sphi 0, %s22
      %s36 = sphi 0, %s38
      %s39 = sphi 0, %s36
      %s40 = sphi 0, %s39
      %s56 = sphi 0, %s40
      %s64 = sphi 0, %s66
      %s67 = sphi 0, %s64
      %s68 = sphi 0, %s67
      %s84 = sphi 0, %s68
      %s88 = sphi 0, %s88
      %s90 = sphi 0, %s88
      %s91 = sphi 0, %s90
      %s105 = sphi 0, %s91
      %s113 = sphi 0, %s115
      %s116 = sphi 0, %s113
      %s117 = sphi 0, %s116
      %s133 = sphi 0, %s117
    $region4: #{tpu_custom_call.1} parent=1 // loop_header_branch
      %15 = sbr.rel (%p13) target = $region8
    $region5: #{tpu_custom_call.1} parent=1 // loop_body
      %s17 = ssub.s32 %s12, 1
      %s18 = ssub.s32 %s12, 2
      %s25 = sadd.s32 1, %s20
      %p26 = scmp.ge.s32.totalorder %s25, 1
      %s27 = scalar_select %p26, 0, %s25
      %s28 = sadd.s32 1, %s19
      %s29 = scalar_select %p26, %s28, %s19
      %p30 = scmp.ge.s32.totalorder %s29, 2
      %s31 = scalar_select %p30, 0, %s29
      %s32 = ssub.s32 %s19, %s31
      %s33 = ssub.s32 %s20, %s27
      %s34 = sor.u32 %s32, %s33
      %p35 = scmp.eq.s32.totalorder %s34, 0
      %s37 = sadd.s32 %s36, 1
      %s38 = scalar_select %p35, %s36, %s37
      %p41 = pneg %p35
      %p42 = scmp.eq.s32.totalorder %s12, 1
      %p43 = por %p41, %p42
      %p44 = scmp.ne.s32.totalorder %s36, %s39
      %p45 = scmp.eq.s32.totalorder %s12, 0
      %p46 = por %p44, %p45
      %p47 = scmp.ne.s32.totalorder %s36, %s39
      %p48 = scmp.eq.s32.totalorder %s17, 1
      %p49 = por %p47, %p48
      %p50 = scmp.ne.s32.totalorder %s39, %s40
      %p51 = scmp.eq.s32.totalorder %s17, 0
      %p52 = por %p50, %p51
      %p53 = scmp.ne.s32.totalorder %s39, %s40
      %p54 = scmp.eq.s32.totalorder %s18, 1
      %p55 = por %p53, %p54
      %p57 = scmp.ne.s32.totalorder %s40, %s56
      %p58 = scmp.eq.s32.totalorder %s18, 0
      %p59 = por %p57, %p58
      %s60 = ssub.s32 %s19, %s31
      %s61 = ssub.s32 %s20, %s27
      %s62 = sor.u32 %s60, %s61
      %p63 = scmp.eq.s32.totalorder %s62, 0
      %s65 = sadd.s32 %s64, 1
      %s66 = scalar_select %p63, %s64, %s65
      %p69 = pneg %p63
      %p70 = scmp.eq.s32.totalorder %s12, 1
      %p71 = por %p69, %p70
      %p72 = scmp.ne.s32.totalorder %s64, %s67
      %p73 = scmp.eq.s32.totalorder %s12, 0
      %p74 = por %p72, %p73
      %p75 = scmp.ne.s32.totalorder %s64, %s67
      %p76 = scmp.eq.s32.totalorder %s17, 1
      %p77 = por %p75, %p76
      %p78 = scmp.ne.s32.totalorder %s67, %s68
      %p79 = scmp.eq.s32.totalorder %s17, 0
      %p80 = por %p78, %p79
      %p81 = scmp.ne.s32.totalorder %s67, %s68
      %p82 = scmp.eq.s32.totalorder %s18, 1
      %p83 = por %p81, %p82
      %p85 = scmp.ne.s32.totalorder %s68, %s84
      %p86 = scmp.eq.s32.totalorder %s18, 0
      %p87 = por %p85, %p86
      %s89 = sadd.s32 %s88, 1
      %p92 = scmp.eq.s32.totalorder %s12, 1
      %p93 = scmp.ne.s32.totalorder %s88, %s90
      %p94 = scmp.eq.s32.totalorder %s12, 0
      %p95 = por %p93, %p94
      %p96 = scmp.ne.s32.totalorder %s88, %s90
      %p97 = scmp.eq.s32.totalorder %s17, 1
      %p98 = por %p96, %p97
      %p99 = scmp.ne.s32.totalorder %s90, %s91
      %p100 = scmp.eq.s32.totalorder %s17, 0
      %p101 = por %p99, %p100
      %p102 = scmp.ne.s32.totalorder %s90, %s91
      %p103 = scmp.eq.s32.totalorder %s18, 1
      %p104 = por %p102, %p103
      %p106 = scmp.ne.s32.totalorder %s91, %s105
      %p107 = scmp.eq.s32.totalorder %s18, 0
      %p108 = por %p106, %p107
      %s109 = ssub.s32 %s19, %s31
      %s110 = ssub.s32 %s20, %s27
      %s111 = sor.u32 %s109, %s110
      %p112 = scmp.eq.s32.totalorder %s111, 0
      %s114 = sadd.s32 %s113, 1
      %s115 = scalar_select %p112, %s113, %s114
      %p118 = pneg %p112
      %p119 = scmp.eq.s32.totalorder %s12, 1
      %p120 = por %p118, %p119
      %p121 = scmp.ne.s32.totalorder %s113, %s116
      %p122 = scmp.eq.s32.totalorder %s12, 0
      %p123 = por %p121, %p122
      %p124 = scmp.ne.s32.totalorder %s113, %s116
      %p125 = scmp.eq.s32.totalorder %s17, 1
      %p126 = por %p124, %p125
      %p127 = scmp.ne.s32.totalorder %s116, %s117
      %p128 = scmp.eq.s32.totalorder %s17, 0
      %p129 = por %p127, %p128
      %p130 = scmp.ne.s32.totalorder %s116, %s117
      %p131 = scmp.eq.s32.totalorder %s18, 1
      %p132 = por %p130, %p131
      %p134 = scmp.ne.s32.totalorder %s117, %s133
      %p135 = scmp.eq.s32.totalorder %s18, 0
      %p136 = por %p134, %p135
      %p137 = scmp.le.s32.totalorder 1, %s12
      %p138 = scmp.lt.s32.totalorder %s12, 3
      %p139 = pnand %p137, %p138
      %p140 = pneg %p139
      // Predicated region
      $region9: #{tpu_custom_call.1} parent=5 // pred_check
        _
      $region10: #{tpu_custom_call.1} parent=5 // pred_check_branch
        %142 = sbr.rel (%p139) target = $region12
      $region11: #{tpu_custom_call.1} parent=5 // pred_region
        %s143 = ssub.s32 %s12, 1
        // Predicated region
        $region13: #{tpu_custom_call.1} parent=11 // pred_check
          %p144 = pneg %p101
        $region14: #{tpu_custom_call.1} parent=11 // pred_check_branch
          %146 = sbr.rel (%p144) target = $region16
        $region15: #{tpu_custom_call.1} parent=11 // pred_region
          _
        $region16: #{tpu_custom_call.1} parent=11 // pred_fallthru
          _
      $region12: #{tpu_custom_call.1} parent=5 // pred_fallthru
        _
      %p147 = scmp.lt.s32.totalorder %s12, 2
      // Predicated region
      $region17: #{tpu_custom_call.1} parent=5 // pred_check
        %p148 = pneg %p147
      $region18: #{tpu_custom_call.1} parent=5 // pred_check_branch
        %150 = sbr.rel (%p148) target = $region20
      $region19: #{tpu_custom_call.1} parent=5 // pred_region
        // Predicated region
        $region21: #{tpu_custom_call.1} parent=19 // pred_check
          %p151 = pneg %p46
        $region22: #{tpu_custom_call.1} parent=19 // pred_check_branch
          %153 = sbr.rel (%p151) target = $region24
        $region23: #{tpu_custom_call.1} parent=19 // pred_region
          %s154 = sand.u32 %s36, 1
          %s155 = scalar_lea.sflag [#allocation3], %s154
          %s156 = sand.u32 %s36, 1
          %s157 = smul.addr %s156, 8
          %s158 = scalar_lea.vmem [#allocation2], %s157
          %s159 = smul.u32 2, %s20
          %s161 = ssub.s32 128, 128
          %162 = vsyncadd %s155, %s161
          %s163 = smul.addr %s19, 2
          %s164 = sadd.s32 %s159, %s163
          %s165 = smul.addr %s164, 64
          %s166 = scalar_lea.hbm %s0, %s165
          %s168 = sshll.u32 %s158, 4
          %s169 = int_to_ptr.vmem [resolvable:$true] %s168
          %171 = dma.hbm_to_vmem [thread:$0]  %s166, 128, %s169, %s155
        $region24: #{tpu_custom_call.1} parent=19 // pred_fallthru
          _
        // Predicated region
        $region25: #{tpu_custom_call.1} parent=19 // pred_check
          %p172 = pneg %p74
        $region26: #{tpu_custom_call.1} parent=19 // pred_check_branch
          %174 = sbr.rel (%p172) target = $region28
        $region27: #{tpu_custom_call.1} parent=19 // pred_region
          %s175 = smul.u32 2, %s20
          %p176 = scmp.lt.s32.totalorder %s19, 1
          %s177 = scalar_select %p176, %s19, 1
          %p178 = scmp.lt.s32.totalorder %s175, 1
          %s179 = scalar_select %p178, %s175, 1
          %s180 = smul.addr %s177, 2
          %s181 = sadd.s32 %s179, %s180
          %s182 = scalar_lea.vmem %s1, %s181
          %s183 = smul.u32 2, %s20
        $region28: #{tpu_custom_call.1} parent=19 // pred_fallthru
          _
      $region20: #{tpu_custom_call.1} parent=5 // pred_fallthru
        _
      %p184 = scmp.le.s32.totalorder 1, %s12
      %p185 = scmp.lt.s32.totalorder %s12, 3
      %p186 = pnand %p184, %p185
      %p187 = pneg %p186
      // Predicated region
      $region29: #{tpu_custom_call.1} parent=5 // pred_check
        _
      $region30: #{tpu_custom_call.1} parent=5 // pred_check_branch
        %189 = sbr.rel (%p186) target = $region32
      $region31: #{tpu_custom_call.1} parent=5 // pred_region
        %s190 = ssub.s32 %s12, 1
        %s191 = sand.u32 %s39, 1
        %s192 = scalar_lea.sflag [#allocation3], %s191
        %s193 = sand.u32 %s39, 1
        %s194 = smul.addr %s193, 8
        %s195 = scalar_lea.vmem [#allocation2], %s194
        // Predicated region
        $region33: #{tpu_custom_call.1} parent=31 // pred_check
          %p196 = pneg %p52
        $region34: #{tpu_custom_call.1} parent=31 // pred_check_branch
          %198 = sbr.rel (%p196) target = $region36
        $region35: #{tpu_custom_call.1} parent=31 // pred_region
          %199 = dma.done %s192, 128
        $region36: #{tpu_custom_call.1} parent=31 // pred_fallthru
          _
        %s200 = sand.u32 %s39, 1
        %s201 = scalar_lea.sflag [#allocation3], %s200
        %s202 = sand.u32 %s39, 1
        %s203 = smul.addr %s202, 8
        %s204 = scalar_lea.vmem [#allocation2], %s203
        %p205 = pneg %p52
        %p206 = pneg %p49
        %s207 = smul.u32 2, %s22
        %p208 = scmp.lt.s32.totalorder %s21, 1
        %s209 = scalar_select %p208, %s21, 1
        %p210 = scmp.lt.s32.totalorder %s207, 1
        %s211 = scalar_select %p210, %s207, 1
        %s212 = smul.addr %s209, 2
        %s213 = sadd.s32 %s211, %s212
        %s214 = scalar_lea.vmem %s1, %s213
        %p215 = pneg %p80
        %p216 = pneg %p77
        %p217 = pneg %p101
        %p218 = pneg %p98
        %p219 = pneg %p129
        %p220 = pneg %p126
        %p221 = scmp.lt.s32.totalorder %s21, 1
        %s222 = scalar_select %p221, %s21, 1
        %p223 = scmp.lt.s32.totalorder %s22, 0
        %s224 = scalar_select %p223, %s22, 0
        %s225 = sadd.s32 %s224, %s222
        %s226 = scalar_lea.vmem %s3, %s225
        %s227 = smul.u32 2, %s22
        %s228 = smul.u32 2, %s22
        %p229 = scmp.lt.s32.totalorder %s21, 1
        %s230 = scalar_select %p229, %s21, 1
        %p231 = scmp.lt.s32.totalorder %s228, 1
        %s232 = scalar_select %p231, %s228, 1
        %s233 = smul.addr %s230, 2
        %s234 = sadd.s32 %s232, %s233
        %s235 = scalar_lea.vmem %s1, %s234
        %s236 = smul.u32 2, %s22
        %p237 = scmp.lt.s32.totalorder %s21, 1
        %s238 = scalar_select %p237, %s21, 1
        %p239 = scmp.lt.s32.totalorder %s22, 0
        %s240 = scalar_select %p239, %s22, 0
        %s241 = sadd.s32 %s240, %s238
        %s242 = scalar_lea.vmem %s3, %s241
        %v243 = vld [vmem:[%s195] sm:$0xff]
        %v244 = vld [vmem:[%s235] sm:$0x3]
        %v245 = vunpack.c.0.s8 %v244
        %v246 = vlaneseq
        %v247 = vshrl.u32 %v246, 7
        %v248 = vlaneseq
        %v249 = vshrl.u32 %v248, 7
        %v250 = vsub.s32 0, %v249
        %v251 = vrot.slane %v245, %v250
        %v252 = vlaneseq
        %v253 = vshrl.u32 %v252, 7
        %v254 = vsub.s32 4, %v253
        %v255 = vrot.slane %v245, %v254
        %v256 = vlaneseq
        %v257 = vshrl.u32 %v256, 7
        %v258 = vsub.s32 0, %v257
        %v259 = vrot.slane %v251, %v258
        %v260 = vlaneseq
        %v261 = vshrl.u32 %v260, 7
        %v262 = vsub.s32 0, %v261
        %v263 = vrot.slane %v255, %v262
        %vm264 = vcmp.eq.s32.totalorder %v247, %v259
        %vm265 = vcmp.eq.s32.totalorder %v247, %v263
        %v267 = vcombine.high %v243, %v243
        %v269 = vsel %vm264, %v243, 0.0
        %v270 = vsel %vm265, %v267, 0.0
        %vm271 = vcmask 1043456
        %v272 = vsel %vm271, %v269, 0.0
        %v273 = vrot.slane %v272, 4
        %v274 = vadd.f32 %v272, %v273
        %v275 = vrot.slane %v274, 2
        %v276 = vadd.f32 %v274, %v275
        %v277 = vrot.slane %v276, 1
        %v278 = vadd.f32 %v276, %v277
        %v279 = vsel %vm271, %v270, 0.0
        %v280 = vrot.slane %v279, 4
        %v281 = vadd.f32 %v279, %v280
        %v282 = vrot.slane %v281, 2
        %v283 = vadd.f32 %v281, %v282
        %v284 = vrot.slane %v283, 1
        %v285 = vadd.f32 %v283, %v284
        %v286 = vmul.f32 %v278, 1.442695
        %v287 = vpow.pop %v286
        %v288 = vmul.f32 %v285, 1.442695
        %v289 = vpow.pop %v288
        %v290 = vld [vmem:[%s2] sm:$0xf]
        %292 = vset.pattern.permute.xlu0 0
        %293 = vperm.xlu0 %292, %v290
        %v294 = vpop.permute.xlu0 %293
        %v296 = vsel %vm264, %v294, 0.0
        %v297 = vsel %vm265, %v294, 0.0
        %v298 = vsel %vm271, %v296, 0.0
        %v299 = vrot.slane %v298, 4
        %v300 = vadd.f32 %v298, %v299
        %v301 = vrot.slane %v300, 2
        %v302 = vadd.f32 %v300, %v301
        %v303 = vrot.slane %v302, 1
        %v304 = vadd.f32 %v302, %v303
        %v305 = vsel %vm271, %v297, 0.0
        %v306 = vrot.slane %v305, 4
        %v307 = vadd.f32 %v305, %v306
        %v308 = vrot.slane %v307, 2
        %v309 = vadd.f32 %v307, %v308
        %v310 = vrot.slane %v309, 1
        %v311 = vadd.f32 %v309, %v310
        %v312 = vmul.f32 %v278, %v304
        %v313 = vmul.f32 %v285, %v311
        %v314 = vsub.f32 1.0, %v287
        %v315 = vsub.f32 1.0, %v289
        %v316 = vmul.f32 %v314, %v314
        %v317 = vmul.f32 %v315, %v315
        %v318 = vsub.f32 0.0, %v316
        %v319 = vsub.f32 0.0, %v317
        %v320 = vmul.f32 %v318, %v312
        %v321 = vmul.f32 %v319, %v313
        %v322 = vadd.f32 %v320, %v321
        %323 = vadd.xlane.f32.xlu0 %v322
        %v324 = vpop.xlane.xlu0 %323
        %vm325 = vcmask 0
        %326 = vst.msk [vmem:[%s242] sm:$0x1] %vm325, %v324
        %p327 = scmp.lt.s32.totalorder %s21, 1
        %s328 = scalar_select %p327, %s21, 1
        %p329 = scmp.lt.s32.totalorder %s22, 0
        %s330 = scalar_select %p329, %s22, 0
        %s331 = sadd.s32 %s330, %s328
        %s332 = scalar_lea.vmem %s3, %s331
        // Predicated region
        $region37: #{tpu_custom_call.1} parent=31 // pred_check
          %p333 = pneg %p126
        $region38: #{tpu_custom_call.1} parent=31 // pred_check_branch
          %335 = sbr.rel (%p333) target = $region40
        $region39: #{tpu_custom_call.1} parent=31 // pred_region
          _
        $region40: #{tpu_custom_call.1} parent=31 // pred_fallthru
          _
      $region32: #{tpu_custom_call.1} parent=5 // pred_fallthru
        _
      %p336 = scmp.le.s32.totalorder 2, %s12
      // Predicated region
      $region41: #{tpu_custom_call.1} parent=5 // pred_check
        %p337 = pneg %p336
      $region42: #{tpu_custom_call.1} parent=5 // pred_check_branch
        %339 = sbr.rel (%p337) target = $region44
      $region43: #{tpu_custom_call.1} parent=5 // pred_region
        %s340 = ssub.s32 %s12, 2
        // Predicated region
        $region45: #{tpu_custom_call.1} parent=43 // pred_check
          %p341 = pneg %p132
        $region46: #{tpu_custom_call.1} parent=43 // pred_check_branch
          %343 = sbr.rel (%p341) target = $region48
        $region47: #{tpu_custom_call.1} parent=43 // pred_region
          %p344 = scmp.lt.s32.totalorder %s23, 1
          %s345 = scalar_select %p344, %s23, 1
          %p346 = scmp.lt.s32.totalorder %s24, 0
          %s347 = scalar_select %p346, %s24, 0
          %s348 = sadd.s32 %s347, %s345
          %s349 = scalar_lea.vmem %s3, %s348
        $region48: #{tpu_custom_call.1} parent=43 // pred_fallthru
          _
      $region44: #{tpu_custom_call.1} parent=5 // pred_fallthru
        _
    $region6: #{tpu_custom_call.1} parent=1 // loop_footer
      %s16 = sadd.s32 1, %s12
    $region7: #{tpu_custom_call.1} parent=1 // loop_footer_branch
      %11 = sbr.rel target = $region3
    $region8: #{tpu_custom_call.1} parent=1 // loop_exit
      _
    %350 = vsyncpa [#allocation3], 1
    %s351 = scalar_lea.sflag [#allocation3], 1
    %352 = vsyncpa %s351, 1

</llo_original>
